<compile_context>
chip_gen: v5e
topology: v5e:2x2
jax: 0.10.0
libtpu: 0.0.40
codegen_flags: <defaults>
</compile_context>

<pallas_src>
import jax
import jax.numpy as jnp
from jax.experimental import pallas as pl
from jax.experimental.pallas import tpu as pltpu

_LANE = 128


def _round_up(x, m):
    return (x + m - 1) // m * m


def _critic_kernel(s_ref, a_ref, w2s_ref, w2a_ref, b2_ref, w3_ref, b3_ref,
                   out_ref):
    # s_ref  : (TB, S)   bf16  state batch tile
    # a_ref  : (TB, A)   bf16  action batch tile
    # w2s_ref: (S, H2)   bf16  fused weight block  W1 @ W2[:H1]   (resident)
    # w2a_ref: (A, H2)   bf16  fc2 weight block applied to action (resident)
    # b2_ref : (1, H2)   f32   fused bias  b1 @ W2[:H1] + b2      (resident)
    # w3_ref : (1, H2)   bf16  fc3 weight as a lane-dense row     (resident)
    # b3_ref : (1, 1)    f32   fc3 bias (SMEM scalar)
    # out_ref: (1, TB)   f32   lane-dense Q-value row
    z = jnp.dot(s_ref[...], w2s_ref[...], preferred_element_type=jnp.float32)
    z = z + jnp.dot(a_ref[...], w2a_ref[...], preferred_element_type=jnp.float32)
    z = jnp.maximum(z + b2_ref[...], 0.0)                    # ReLU, f32 on VPU

    # fc3 as VPU multiply + XLU cross-lane reduce (avoids a 1-column MXU matmul).
    w3 = w3_ref[...].astype(jnp.float32)                     # (1, H2), tiny cast
    q = jnp.sum(z * w3, axis=-1) + b3_ref[0, 0]              # (TB,)
    out_ref[...] = q[None, :]                                # lane-dense (1, TB) store


def critic_forward(state, action, fused, *, max_tile=4096, single_step_max=1024):
    """Critic forward pass. `fused` comes from fuse_critic_params()."""
    B = state.shape[0]
    s16 = state.astype(jnp.bfloat16)          # bf16 activations: native MXU path
    a16 = action.astype(jnp.bfloat16)         # and half the activation HBM bytes
    w2s, w2a, b2, w3, b3 = (fused["w2s"], fused["w2a"], fused["b2"],
                            fused["w3"], fused["b3"])
    S, H2 = w2s.shape
    A = w2a.shape[0]

    if B <= single_step_max:
        tb = B                                # one step: launch-latency bound anyway
    else:
        # >= 2 grid steps (v7x megacore) with tiles big enough to amortize the
        # ~0.35 us per-step overhead; 128-multiples keep the (1, tb) output
        # block lane-aligned and the batch tiles sublane-aligned.
        tb = min(max_tile, _round_up(pl.cdiv(B, 2), _LANE))
    grid = (pl.cdiv(B, tb),)                  # ragged B: Pallas clips the last block

    out_row = pl.pallas_call(
        _critic_kernel,
        out_shape=jax.ShapeDtypeStruct((1, B), jnp.float32),
        grid=grid,
        in_specs=[
            pl.BlockSpec((tb, S), lambda i: (i, 0)),            # state: batch-tiled
            pl.BlockSpec((tb, A), lambda i: (i, 0)),            # action: batch-tiled
            pl.BlockSpec((S, H2), lambda i: (0, 0)),            # fused W2s: resident
            pl.BlockSpec((A, H2), lambda i: (0, 0)),            # W2a: resident
            pl.BlockSpec((1, H2), lambda i: (0, 0)),            # fused b2: resident
            pl.BlockSpec((1, H2), lambda i: (0, 0)),            # w3 row: resident
            pl.BlockSpec(memory_space=pltpu.MemorySpace.SMEM),  # b3 scalar in SMEM
        ],
        out_specs=pl.BlockSpec((1, tb), lambda i: (0, i)),      # lane-dense row
        compiler_params=pltpu.CompilerParams(
            dimension_semantics=("parallel",)),
    )(s16, a16, w2s, w2a, b2, w3, b3)

    return out_row.reshape(B, 1)              # module output shape (B, 1)


def init_critic_params(key, state_size, action_size, fcs1_units, fc2_units):
    """Deterministic synthetic parameters (torch.nn.Linear-style init).

    Weights stored pre-transposed to (in_features, out_features); biases 0.03
    as in Critic.reset_parameters.
    """
    k1, k2, k3 = jax.random.split(key, 3)

    def linear_w(k, fan_in, fan_out):
        bound = 1.0 / jnp.sqrt(jnp.float32(fan_in))
        return jax.random.uniform(k, (fan_in, fan_out), jnp.float32, -bound, bound)

    w1 = linear_w(k1, state_size, fcs1_units)                 # fcs1
    w2 = linear_w(k2, fcs1_units + action_size, fc2_units)    # fc2 (on the concat)
    w3 = linear_w(k3, fc2_units, 1)                           # fc3

    return {
        "w1": w1,
        "b1": jnp.full((1, fcs1_units), 0.03, jnp.float32),
        "w2s": w2[:fcs1_units, :],     # fc2 rows applied to the state branch
        "w2a": w2[fcs1_units:, :],     # fc2 rows applied to the action
        "b2": jnp.full((1, fc2_units), 0.03, jnp.float32),
        "w3": w3,
        "b3": jnp.full((1, 1), 0.03, jnp.float32),
    }


def fuse_critic_params(params, weight_dtype=jnp.bfloat16):
    """Offline algebraic fold of fcs1 into fc2.

    Valid because Critic.forward applies NO activation between fcs1 and the
    concat (s = fcs1(state); x = cat([s, action])).
    """
    return {
        "w2s": (params["w1"] @ params["w2s"]).astype(weight_dtype),          # (S, H2)
        "w2a": params["w2a"].astype(weight_dtype),                           # (A, H2)
        "b2": (params["b1"] @ params["w2s"] + params["b2"]).astype(jnp.float32),
        "w3": params["w3"].T.astype(weight_dtype),                           # (1, H2)
        "b3": params["b3"].astype(jnp.float32),                              # (1, 1)
    }


def critic_reference(state, action, params):
    """Pure-JAX f32 reference mirroring the PyTorch forward exactly (unfused)."""
    s = state @ params["w1"] + params["b1"]
    x = jnp.concatenate([s, action], axis=1)
    w2 = jnp.concatenate([params["w2s"], params["w2a"]], axis=0)
    x = jax.nn.relu(x @ w2 + params["b2"])
    return x @ params["w3"] + params["b3"]


def critic_reference_fused(state, action, fused):
    """Pure-JAX reference using the SAME fused/bf16 params + bf16 activations."""
    s16 = state.astype(jnp.bfloat16)
    a16 = action.astype(jnp.bfloat16)
    z = (jnp.dot(s16, fused["w2s"], preferred_element_type=jnp.float32)
         + jnp.dot(a16, fused["w2a"], preferred_element_type=jnp.float32)
         + fused["b2"])
    z = jax.nn.relu(z)
    q = (z * fused["w3"].astype(jnp.float32)).sum(-1, keepdims=True)
    return q + fused["b3"][0, 0]


if __name__ == "__main__":
    # Small shapes consistent with the module's forward.
    B = 8
    STATE_SIZE = 16
    ACTION_SIZE = 8
    FCS1_UNITS = 128
    FC2_UNITS = 128

    key = jax.random.PRNGKey(0)
    kp, ks, ka = jax.random.split(key, 3)

    params = init_critic_params(kp, STATE_SIZE, ACTION_SIZE, FCS1_UNITS, FC2_UNITS)
    fused = fuse_critic_params(params)

    state = jax.random.normal(ks, (B, STATE_SIZE), jnp.float32)
    action = jax.random.normal(ka, (B, ACTION_SIZE), jnp.float32)

    out = jax.block_until_ready(critic_forward(state, action, fused))
    assert out.shape == (B, 1), out.shape

    # Tight check: kernel vs. pure-JAX with identical fused/bf16 numerics.
    ref_fused = critic_reference_fused(state, action, fused)
    assert jnp.allclose(out, ref_fused, atol=2e-3, rtol=2e-3), (out, ref_fused)

    # Module-semantics check vs. the unfused f32 reference. Deviations are
    # bf16 weight/activation quantization + the f32 re-association of the fold.
    ref = critic_reference(state, action, params)
    assert jnp.allclose(out, ref, atol=2e-2, rtol=2e-2), (out, ref)

    # Exercise the tiled multi-step path (>= 2 grid steps, resident weights,
    # lane-dense output blocks) with a modest batch that divides evenly.
    B2 = 2560
    ks2, ka2 = jax.random.split(jax.random.PRNGKey(1))
    state2 = jax.random.normal(ks2, (B2, STATE_SIZE), jnp.float32)
    action2 = jax.random.normal(ka2, (B2, ACTION_SIZE), jnp.float32)
    out2 = jax.block_until_ready(critic_forward(state2, action2, fused))
    ref2 = critic_reference_fused(state2, action2, fused)
    assert out2.shape == (B2, 1), out2.shape
    assert jnp.allclose(out2, ref2, atol=2e-3, rtol=2e-3)

    print("KERNEL_OK")
</pallas_src>

<mosaic_0001>
module attributes {stable_mosaic.version = 11 : i64} {
  func.func @_critic_kernel(%arg0: i32, %arg1: memref<8x16xbf16, #tpu.memory_space<vmem>>, %arg2: memref<8x8xbf16, #tpu.memory_space<vmem>>, %arg3: memref<16x128xbf16, #tpu.memory_space<vmem>>, %arg4: memref<8x128xbf16, #tpu.memory_space<vmem>>, %arg5: memref<1x128xf32, #tpu.memory_space<vmem>>, %arg6: memref<1x128xbf16, #tpu.memory_space<vmem>>, %arg7: memref<1x1xf32, #tpu.memory_space<smem>>, %arg8: memref<1x8xf32, #tpu.memory_space<vmem>>) attributes {dimension_semantics = [#tpu.dimension_semantics<parallel>], iteration_bounds = array<i64: 1>, scalar_prefetch = 0 : i64, scratch_operands = 0 : i64, tpu.core_type = #tpu.core_type<tc>, window_params = [{transform_indices = @transform_0, window_bounds = array<i64: 8, 16>}, {transform_indices = @transform_1, window_bounds = array<i64: 8, 8>}, {pipeline_mode = #tpu.pipeline_mode<synchronous>, transform_indices = @transform_2, window_bounds = array<i64: 16, 128>}, {pipeline_mode = #tpu.pipeline_mode<synchronous>, transform_indices = @transform_3, window_bounds = array<i64: 8, 128>}, {pipeline_mode = #tpu.pipeline_mode<synchronous>, transform_indices = @transform_4, window_bounds = array<i64: 1, 128>}, {pipeline_mode = #tpu.pipeline_mode<synchronous>, transform_indices = @transform_5, window_bounds = array<i64: 1, 128>}, {transform_indices = @transform_6, window_bounds = array<i64: 1, 1>}, {transform_indices = @transform_7, window_bounds = array<i64: 1, 8>}]} {
    %c0 = arith.constant 0 : index
    %c0_0 = arith.constant 0 : index
    %0 = vector.load %arg1[%c0, %c0_0] : memref<8x16xbf16, #tpu.memory_space<vmem>>, vector<8x16xbf16>
    %c0_1 = arith.constant 0 : index
    %c0_2 = arith.constant 0 : index
    %1 = vector.load %arg3[%c0_1, %c0_2] : memref<16x128xbf16, #tpu.memory_space<vmem>>, vector<16x128xbf16>
    %cst = arith.constant dense<0.000000e+00> : vector<8x128xf32>
    %2 = tpu.matmul %0, %1, %cst {dimension_numbers = #tpu.dot_dimension_numbers<[1], [0], [0], [1], [0, 0, 1, 1], [], []>} : vector<8x16xbf16>, vector<16x128xbf16>, vector<8x128xf32> -> vector<8x128xf32>
    %c0_3 = arith.constant 0 : index
    %c0_4 = arith.constant 0 : index
    %3 = vector.load %arg2[%c0_3, %c0_4] : memref<8x8xbf16, #tpu.memory_space<vmem>>, vector<8x8xbf16>
    %c0_5 = arith.constant 0 : index
    %c0_6 = arith.constant 0 : index
    %4 = vector.load %arg4[%c0_5, %c0_6] : memref<8x128xbf16, #tpu.memory_space<vmem>>, vector<8x128xbf16>
    %cst_7 = arith.constant dense<0.000000e+00> : vector<8x128xf32>
    %5 = tpu.matmul %3, %4, %cst_7 {dimension_numbers = #tpu.dot_dimension_numbers<[1], [0], [0], [1], [0, 0, 1, 1], [], []>} : vector<8x8xbf16>, vector<8x128xbf16>, vector<8x128xf32> -> vector<8x128xf32>
    %6 = arith.addf %2, %5 : vector<8x128xf32>
    %c0_8 = arith.constant 0 : index
    %c0_9 = arith.constant 0 : index
    %7 = vector.load %arg5[%c0_8, %c0_9] : memref<1x128xf32, #tpu.memory_space<vmem>>, vector<1x128xf32>
    %8 = vector.broadcast %7 : vector<1x128xf32> to vector<8x128xf32>
    %9 = arith.addf %6, %8 : vector<8x128xf32>
    %cst_10 = arith.constant 0.000000e+00 : f32
    %10 = vector.broadcast %cst_10 : f32 to vector<8x128xf32>
    %11 = arith.maximumf %9, %10 : vector<8x128xf32>
    %c0_11 = arith.constant 0 : index
    %c0_12 = arith.constant 0 : index
    %12 = vector.load %arg6[%c0_11, %c0_12] : memref<1x128xbf16, #tpu.memory_space<vmem>>, vector<1x128xbf16>
    %13 = arith.extf %12 : vector<1x128xbf16> to vector<1x128xf32>
    %14 = vector.broadcast %13 : vector<1x128xf32> to vector<8x128xf32>
    %15 = arith.mulf %11, %14 : vector<8x128xf32>
    %cst_13 = arith.constant dense<0.000000e+00> : vector<8xf32>
    %16 = vector.multi_reduction <add>, %15, %cst_13 [1] : vector<8x128xf32> to vector<8xf32>
    %c0_14 = arith.constant 0 : index
    %c0_15 = arith.constant 0 : index
    %17 = memref.load %arg7[%c0_14, %c0_15] : memref<1x1xf32, #tpu.memory_space<smem>>
    %18 = vector.broadcast %17 : f32 to vector<8xf32>
    %19 = arith.addf %16, %18 : vector<8xf32>
    %20 = vector.shape_cast %19 : vector<8xf32> to vector<1x8xf32>
    %c0_16 = arith.constant 0 : index
    %c0_17 = arith.constant 0 : index
    %21 = vector.load %arg8[%c0_16, %c0_17] : memref<1x8xf32, #tpu.memory_space<vmem>>, vector<1x8xf32>
    tpu.vector_store %arg8[%c0_16, %c0_17], %20 {strides = array<i32>} : memref<1x8xf32, #tpu.memory_space<vmem>>, vector<1x8xf32>,
    return
  }
  func.func @transform_0(%arg0: i32) -> (i32, i32) {
    %c0_i32 = arith.constant 0 : i32
    %c0_i32_0 = arith.constant 0 : i32
    return %arg0, %c0_i32 : i32, i32
  }
  func.func @transform_1(%arg0: i32) -> (i32, i32) {
    %c0_i32 = arith.constant 0 : i32
    %c0_i32_0 = arith.constant 0 : i32
    return %arg0, %c0_i32 : i32, i32
  }
  func.func @transform_2(%arg0: i32) -> (i32, i32) {
    %c0_i32 = arith.constant 0 : i32
    %c0_i32_0 = arith.constant 0 : i32
    %c0_i32_1 = arith.constant 0 : i32
    return %c0_i32, %c0_i32_0 : i32, i32
  }
  func.func @transform_3(%arg0: i32) -> (i32, i32) {
    %c0_i32 = arith.constant 0 : i32
    %c0_i32_0 = arith.constant 0 : i32
    %c0_i32_1 = arith.constant 0 : i32
    return %c0_i32, %c0_i32_0 : i32, i32
  }
  func.func @transform_4(%arg0: i32) -> (i32, i32) {
    %c0_i32 = arith.constant 0 : i32
    %c0_i32_0 = arith.constant 0 : i32
    %c0_i32_1 = arith.constant 0 : i32
    return %c0_i32, %c0_i32_0 : i32, i32
  }
  func.func @transform_5(%arg0: i32) -> (i32, i32) {
    %c0_i32 = arith.constant 0 : i32
    %c0_i32_0 = arith.constant 0 : i32
    %c0_i32_1 = arith.constant 0 : i32
    return %c0_i32, %c0_i32_0 : i32, i32
  }
  func.func @transform_6(%arg0: i32) -> (i32, i32) {
    %c0_i32 = arith.constant 0 : i32
    %c0_i32_0 = arith.constant 0 : i32
    %c0_i32_1 = arith.constant 0 : i32
    return %c0_i32, %c0_i32_0 : i32, i32
  }
  func.func @transform_7(%arg0: i32) -> (i32, i32) {
    %c0_i32 = arith.constant 0 : i32
    %c0_i32_0 = arith.constant 0 : i32
    return %c0_i32, %arg0 : i32, i32
  }
}

</mosaic_0001>

<llo_original>
// kernel: tpu_custom_call.1
$region0: #{tpu_custom_call.1}
  #allocation0 [shape = 'u32[]', space=smem, size = 0x4, offset = 0x4, fixed_abs, tag = 'smem constant byte address 0x4 - core index']
  #allocation1 [shape = 'u32[72,128]{1,0:T(1,128)}', space=vmem, size = 0x9000, scoped, tag = 'internal scratch']
  #allocation2 [shape = 'f32[1,1]{1,0:T(1,128)S(6)}', space=smem, size = 0x200, scoped, tag = 'scoped memory for tpu_custom_call.1']
  %s0 = inlined_call_operand.hbm [shape: bf16[8,16], index: 0, kind: input, shape index: {}]
  %s1 = inlined_call_operand.hbm [shape: bf16[8,8], index: 1, kind: input, shape index: {}]
  %s2 = inlined_call_operand.hbm [shape: bf16[16,128], index: 2, kind: input, shape index: {}]
  %s3 = inlined_call_operand.vmem [shape: bf16[8,128], index: 3, kind: input, shape index: {}]
  %s4 = inlined_call_operand.vmem [shape: f32[1,128], index: 4, kind: input, shape index: {}]
  %s5 = inlined_call_operand.vmem [shape: bf16[1,128], index: 5, kind: input, shape index: {}]
  %s6 = inlined_call_operand.<no memory space> [shape: f32[1,1], index: 6, kind: input, shape index: {}]
  %s7 = inlined_call_operand.hbm [shape: f32[1,8], index: 7, kind: output, shape index: {}]
  %s8 = sld [smem:[#allocation0]]
  $region50: #{tpu_custom_call.1} parent=0
    _
  %s10 = ssub.s32 1, %s8
  %s11 = scalar_select 0, %s10, %s8
  %12 = sst [smem:[#allocation2]] %s6
  $region1: #{tpu_custom_call.1} parent=0
    #allocation3 [shape = 'u8[2048]{0}', space=vmem, size = 0x800, scoped, tag = 'input window, operand 0, single buffered']
    #allocation4 [shape = 's32[1]{0}', space=sflag, size = 0x4, scoped, tag = 'scoped memory for tpu_custom_call.1']
    #allocation5 [shape = 's32[1]{0}', space=sflag, size = 0x4, scoped, tag = 'scoped memory for tpu_custom_call.1']
    #allocation6 [shape = 'u8[2048]{0}', space=vmem, size = 0x800, scoped, tag = 'input window, operand 1, single buffered']
    #allocation7 [shape = 's32[1]{0}', space=sflag, size = 0x4, scoped, tag = 'scoped memory for tpu_custom_call.1']
    #allocation8 [shape = 'u8[4096]{0}', space=vmem, size = 0x1000, scoped, tag = 'input window, operand 2, single buffered']
    #allocation9 [shape = 'u8[512]{0}', space=vmem, size = 0x400, scoped, tag = 'output window, operand 0, single buffered']
    %13 = vsyncpa [#allocation4], 0
    %14 = vsyncpa [#allocation7], 0
    %15 = vsyncpa [#allocation5], 0
    // Predicated region
    $region2: #{tpu_custom_call.1} parent=1 // pred_check
      _
    $region3: #{tpu_custom_call.1} parent=1 // pred_check_branch
      %17 = sbr.rel (0) target = $region5
    $region4: #{tpu_custom_call.1} parent=1 // pred_region
      %19 = vsyncadd [#allocation4], 0
      %s21 = sshll.u32 %s0, 4
      %s22 = int_to_ptr.hbm [resolvable:$true] %s21
      %s23 = sshll.u32 [#allocation3], 4
      %s24 = int_to_ptr.vmem [resolvable:$true] %s23
      %26 = dma.hbm_to_vmem [thread:$0]  %s22, 64, %s24, [#allocation4]
    $region5: #{tpu_custom_call.1} parent=1 // pred_fallthru
      _
    // Predicated region
    $region6: #{tpu_custom_call.1} parent=1 // pred_check
      _
    $region7: #{tpu_custom_call.1} parent=1 // pred_check_branch
      %28 = sbr.rel (0) target = $region9
    $region8: #{tpu_custom_call.1} parent=1 // pred_region
      %30 = vsyncadd [#allocation7], 0
      %s32 = sshll.u32 %s1, 4
      %s33 = int_to_ptr.hbm [resolvable:$true] %s32
      %s34 = sshll.u32 [#allocation6], 4
      %s35 = int_to_ptr.vmem [resolvable:$true] %s34
      %37 = dma.hbm_to_vmem [thread:$0]  %s33, 64, %s35, [#allocation7]
    $region9: #{tpu_custom_call.1} parent=1 // pred_fallthru
      _
    // Predicated region
    $region10: #{tpu_custom_call.1} parent=1 // pred_check
      _
    $region11: #{tpu_custom_call.1} parent=1 // pred_check_branch
      %39 = sbr.rel (0) target = $region13
    $region12: #{tpu_custom_call.1} parent=1 // pred_region
      %41 = vsyncadd [#allocation7], 0
      %s42 = sshll.u32 %s2, 4
      %s43 = int_to_ptr.hbm [resolvable:$true] %s42
      %s44 = sshll.u32 [#allocation8], 4
      %s45 = int_to_ptr.vmem [resolvable:$true] %s44
      %50 = dma.hbm_to_vmem [thread:$0]  %s43, 128, %s45, [#allocation7], 64, 64, 4
    $region13: #{tpu_custom_call.1} parent=1 // pred_fallthru
      _
    // Predicated region
    $region14: #{tpu_custom_call.1} parent=1 // pred_check
      _
    $region15: #{tpu_custom_call.1} parent=1 // pred_check_branch
      %52 = sbr.rel (0) target = $region17
    $region16: #{tpu_custom_call.1} parent=1 // pred_region
      _
    $region17: #{tpu_custom_call.1} parent=1 // pred_fallthru
      _
    // Predicated region
    $region18: #{tpu_custom_call.1} parent=1 // pred_check
      _
    $region19: #{tpu_custom_call.1} parent=1 // pred_check_branch
      %54 = sbr.rel (0) target = $region21
    $region20: #{tpu_custom_call.1} parent=1 // pred_region
      _
    $region21: #{tpu_custom_call.1} parent=1 // pred_fallthru
      _
    // Predicated region
    $region22: #{tpu_custom_call.1} parent=1 // pred_check
      _
    $region23: #{tpu_custom_call.1} parent=1 // pred_check_branch
      %56 = sbr.rel (0) target = $region25
    $region24: #{tpu_custom_call.1} parent=1 // pred_region
      _
    $region25: #{tpu_custom_call.1} parent=1 // pred_fallthru
      _
    // Predicated region
    $region26: #{tpu_custom_call.1} parent=1 // pred_check
      _
    $region27: #{tpu_custom_call.1} parent=1 // pred_check_branch
      %58 = sbr.rel (0) target = $region29
    $region28: #{tpu_custom_call.1} parent=1 // pred_region
      _
    $region29: #{tpu_custom_call.1} parent=1 // pred_fallthru
      _
    // Predicated region
    $region30: #{tpu_custom_call.1} parent=1 // pred_check
      _
    $region31: #{tpu_custom_call.1} parent=1 // pred_check_branch
      %60 = sbr.rel (0) target = $region33
    $region32: #{tpu_custom_call.1} parent=1 // pred_region
      %62 = dma.done [#allocation4], 64
    $region33: #{tpu_custom_call.1} parent=1 // pred_fallthru
      _
    // Predicated region
    $region34: #{tpu_custom_call.1} parent=1 // pred_check
      _
    $region35: #{tpu_custom_call.1} parent=1 // pred_check_branch
      %64 = sbr.rel (0) target = $region37
    $region36: #{tpu_custom_call.1} parent=1 // pred_region
      %66 = dma.done [#allocation7], 64
    $region37: #{tpu_custom_call.1} parent=1 // pred_fallthru
      _
    // Predicated region
    $region38: #{tpu_custom_call.1} parent=1 // pred_check
      _
    $region39: #{tpu_custom_call.1} parent=1 // pred_check_branch
      %68 = sbr.rel (0) target = $region41
    $region40: #{tpu_custom_call.1} parent=1 // pred_region
      %70 = dma.done [#allocation7], 128
    $region41: #{tpu_custom_call.1} parent=1 // pred_fallthru
      _
    %v72 = vld [vmem:[#allocation3] sm:$0xf]
    %v73 = vld [vmem:[#allocation8] sm:$0xf]
    %v74 = vld [vmem:[#allocation8 + $0x4] sm:$0xf]
    %v75 = vld [vmem:[#allocation6] sm:$0xf]
    %v76 = vld [vmem:[%s3] sm:$0xf]
    %vm77 = vcmask 64512
    %v79 = vsel %vm77, %v75, 0
    %vm81 = vcmask 1043456
    %v83 = vsel %vm81, %v76, 0
    %85 = vmatpush.bf16.msra.mxu0 0
    %86 = vmatpush.bf16.msra.mxu0 0
    %87 = vmatpush.bf16.msra.mxu0 0
    %88 = vmatpush.bf16.msra.mxu0 0
    %89 = vmatpush.bf16.msra.mxu0 0
    %90 = vmatpush.bf16.msra.mxu0 0
    %91 = vmatpush.bf16.msra.mxu0 0
    %92 = vmatpush.bf16.msra.mxu0 %v83
    %93 = vmatmul.bf16.gmra.mxu0 %v79
    %v94 = vpop.f32.mrf.mxu0
    %v95 = vadd.f32 0.0, %v94
    %v96 = vpop.f32.mrf.mxu0
    %97 = vdwg.mxu0
    %v100 = vunpack.c.l.b16 %v73
    %v101 = vunpack.c.l.b16 %v74
    %v102 = vpack.c.b16 %v101, %v100
    %vm104 = vcmask 130048
    %v106 = vsel %vm104, %v72, 0
    %108 = vmatpush.bf16.msra.mxu0 0
    %109 = vmatpush.bf16.msra.mxu0 0
    %110 = vmatpush.bf16.msra.mxu0 0
    %111 = vmatpush.bf16.msra.mxu0 0
    %112 = vmatpush.bf16.msra.mxu0 0
    %113 = vmatpush.bf16.msra.mxu0 0
    %114 = vmatpush.bf16.msra.mxu0 0
    %115 = vmatpush.bf16.msra.mxu0 %v102
    %116 = vmatmul.bf16.gmra.mxu0 %v106
    %v117 = vpop.f32.mrf.mxu0
    %v118 = vadd.f32 %v95, %v117
    %v119 = vpop.f32.mrf.mxu0
    %120 = vdwg.mxu0
    %v121 = vld [vmem:[%s4] sm:$0x1]
    %v123 = vperm.slane %v121, 0
    %v125 = vadd.f32 %v118, %v123
    %v126 = vmax.f32 %v125, 0.0
    %v127 = vld [vmem:[%s5] sm:$0x1]
    %v128 = vunpack.c.l.bf16 %v127
    %v129 = vperm.slane %v128, 0
    %v130 = vmul.f32 %v126, %v129
    %131 = vadd.xlane.f32.xlu0 %v130
    %v132 = vpop.xlane.xlu0 %131
    %s133 = sld [smem:[#allocation2]]
    %v134 = vstv %s133
    %v135 = vadd.f32 %v132, %v134
    %v137 = vlaneseq
    %v138 = vand.u32 %v137, 127
    %v139 = vperm.slane %v135, %v138
    %vm141 = vcmask 57344
    %142 = vst.msk [vmem:[#allocation9] sm:$0x1] %vm141, %v139
    // Predicated region
    $region42: #{tpu_custom_call.1} parent=1 // pred_check
      _
    $region43: #{tpu_custom_call.1} parent=1 // pred_check_branch
      %144 = sbr.rel (0) target = $region45
    $region44: #{tpu_custom_call.1} parent=1 // pred_region
      %146 = vsyncadd [#allocation5], 0
      %s148 = sshll.u32 [#allocation9], 4
      %s149 = int_to_ptr.vmem [resolvable:$true] %s148
      %s150 = sshll.u32 %s7, 4
      %s151 = int_to_ptr.hbm [resolvable:$true] %s150
      %153 = dma.vmem_to_hbm [thread:$0]  %s149, 16, %s151, [#allocation5]
    $region45: #{tpu_custom_call.1} parent=1 // pred_fallthru
      _
    // Predicated region
    $region46: #{tpu_custom_call.1} parent=1 // pred_check
      _
    $region47: #{tpu_custom_call.1} parent=1 // pred_check_branch
      %155 = sbr.rel (0) target = $region49
    $region48: #{tpu_custom_call.1} parent=1 // pred_region
      %157 = dma.done [#allocation5], 16
    $region49: #{tpu_custom_call.1} parent=1 // pred_fallthru
      _
    %158 = vsyncpa [#allocation4], 1
    %159 = vsyncpa [#allocation7], 1
    %160 = vsyncpa [#allocation5], 1

</llo_original>
